<compile_context>
chip_gen: v5e
topology: v5e:2x2
jax: 0.10.0
libtpu: 0.0.40
codegen_flags: <defaults>
</compile_context>

<pallas_src>
import functools
import string

import jax
import jax.numpy as jnp
from jax import lax
from jax.experimental import pallas as pl
from jax.experimental.pallas import tpu as pltpu

ALL_CHARACTERS = string.ascii_lowercase + ' '
N_CHARACTERS = len(ALL_CHARACTERS)          # 27
N_HIDDEN = 32
N_LAYERS = 1
CHAR_TO_IDX = {c: i for i, c in enumerate(ALL_CHARACTERS)}

LANE = 128                                  # TPU lane width (per-gate padded width)
SUBLANE = 8


def _round_up(n, m):
    return ((n + m - 1) // m) * m


# ----------------------------- Pallas kernel ------------------------------ #
def char_rnn_kernel(idx_ref, h0_ref, gi_table_ref, w_hh_ref, b_hn_ref,
                    w_dec_ref, b_dec_ref, logp_ref, hn_ref,
                    *, seq_len, batch_size):
    """GRU recurrence + decoder + log-softmax, fully resident in VMEM.

    Input projections come from a lookup table (inputs are one-hot), so the per-step
    critical path is one (B,128)@(128,384) MXU op + lane-aligned gate elementwise.
    """
    HP = h0_ref.shape[1]                    # 128 (lane-aligned per-gate width)
    B = batch_size

    w_hh = w_hh_ref[...]                    # (HP, 3*HP)  -- hoisted out of the loop
    b_hn = b_hn_ref[...]                    # (1, HP)     -- n-gate hidden bias only

    def step(t, h):
        # Index-gather: one VMEM row per batch element (biases already folded in).
        rows = [gi_table_ref[pl.ds(idx_ref[t * B + b], 1), :] for b in range(B)]
        gi = rows[0] if B == 1 else jnp.concatenate(rows, axis=0)        # (B, 3*HP)

        gh = jnp.dot(h, w_hh, preferred_element_type=jnp.float32)        # (B, 3*HP)

        # sigmoid(x) == 0.5*tanh(0.5*x) + 0.5 : one EUP tanh vs exp+reciprocal,
        # shortening the serial r -> n dependency chain.
        r = 0.5 * jnp.tanh(0.5 * (gi[:, 0:HP] + gh[:, 0:HP])) + 0.5
        z = 0.5 * jnp.tanh(0.5 * (gi[:, HP:2 * HP] + gh[:, HP:2 * HP])) + 0.5
        # PyTorch GRU semantics: n = tanh(gi_n + r * (gh_n + b_hn)).
        n = jnp.tanh(gi[:, 2 * HP:3 * HP] + r * (gh[:, 2 * HP:3 * HP] + b_hn))
        return (1.0 - z) * n + z * h

    unroll = True if seq_len <= 32 else 8
    h = lax.fori_loop(0, seq_len, step, h0_ref[...], unroll=unroll)      # (B, HP)

    # Decoder + numerically-stable log-softmax (lane-dense: O padded to 128, padded
    # logits sit at -1e30 via the bias and vanish from the softmax).
    logits = jnp.dot(h, w_dec_ref[...],
                     preferred_element_type=jnp.float32) + b_dec_ref[...]    # (B, OP)
    m = jnp.max(logits, axis=1, keepdims=True)
    lse = jnp.log(jnp.sum(jnp.exp(logits - m), axis=1, keepdims=True)) + m
    logp_ref[...] = logits - lse
    hn_ref[...] = h


# ------------------------------- wrapper ----------------------------------- #
def char_rnn_forward(x, h0, params):
    """x: (S, B, I) one-hot float32 (CharRNN/string_to_tensor inputs), h0: (1, B, H).
    Returns (log_probs (B, O), hidden (1, B, H)) — same semantics as CharRNN.forward."""
    S, B, I = x.shape
    H = params['w_hh_l0'].shape[1]
    O = params['w_dec'].shape[0]
    f32 = jnp.float32

    HP = LANE                                   # per-gate width -> 128 lanes
    OP = _round_up(O, LANE)                     # lane-dense decoder output
    IR = _round_up(I, SUBLANE)                  # lookup-table rows (sublane aligned)

    # One-hot -> index (exploits the one-hot structure of string_to_tensor inputs).
    idx = jnp.argmax(x, axis=-1).astype(jnp.int32).reshape(S * B)           # (S*B,)

    # ---- gate-padded, pre-transposed parameters (wrapper-side glue) ----
    # PyTorch gate order is (r, z, n); each gate gets its own 128-lane group.
    gi_table = jnp.zeros((IR, 3 * HP), f32)     # row c = input projection for char c
    w_hh_p = jnp.zeros((HP, 3 * HP), f32)
    b_gates = jnp.zeros((1, 3 * HP), f32)       # b_ih (+ b_hh for r,z) folded
    for g in range(3):
        gi_table = gi_table.at[:I, g * HP:g * HP + H].set(
            params['w_ih_l0'][g * H:(g + 1) * H, :].T)
        w_hh_p = w_hh_p.at[:H, g * HP:g * HP + H].set(
            params['w_hh_l0'][g * H:(g + 1) * H, :].T)
        b = params['b_ih_l0'][g * H:(g + 1) * H]
        if g < 2:                               # r, z: pre-sum hidden bias
            b = b + params['b_hh_l0'][g * H:(g + 1) * H]
        b_gates = b_gates.at[0, g * HP:g * HP + H].set(b)
    gi_table = gi_table + b_gates               # fold biases into the lookup rows
    # n-gate hidden bias must stay inside r*(gh_n + b_hn)  (PyTorch semantics).
    b_hn_p = jnp.zeros((1, HP), f32).at[0, :H].set(params['b_hh_l0'][2 * H:3 * H])

    # Decoder: pad columns exactly zero (keeps the -1e30 pad-bias guarantee intact).
    w_dec_p = jnp.zeros((HP, OP), f32).at[:H, :O].set(params['w_dec'].T)
    b_dec_p = jnp.full((1, OP), -1e30, f32).at[0, :O].set(params['b_dec'])

    h0_p = jnp.zeros((B, HP), f32).at[:, :H].set(h0[0])

    vmem = pl.BlockSpec(memory_space=pltpu.MemorySpace.VMEM)
    smem = pl.BlockSpec(memory_space=pltpu.MemorySpace.SMEM)
    kernel = functools.partial(char_rnn_kernel, seq_len=S, batch_size=B)

    logp_p, hn_p = pl.pallas_call(
        kernel,
        out_shape=(jax.ShapeDtypeStruct((B, OP), f32),
                   jax.ShapeDtypeStruct((B, HP), f32)),
        in_specs=[smem, vmem, vmem, vmem, vmem, vmem, vmem],
        out_specs=(vmem, vmem),
        compiler_params=pltpu.CompilerParams(
            # Resident buffers total ~0.5 MiB (gi_table 48 KiB, w_hh 192 KiB,
            # w_dec 64 KiB, rest tiny); 8 MiB leaves ample headroom.
            vmem_limit_bytes=8 * 1024 * 1024),
    )(idx, h0_p, gi_table, w_hh_p, b_hn_p, w_dec_p, b_dec_p)

    return logp_p[:, :O], hn_p[:, :H][None]     # hidden back to (n_layers, B, H)


# ------------------------- deterministic params ---------------------------- #
def init_params(key, input_size, hidden_size, output_size):
    ks = jax.random.split(key, 6)
    bound = 1.0 / jnp.sqrt(hidden_size)
    u = lambda k, shape: jax.random.uniform(k, shape, jnp.float32, -bound, bound)
    return {
        'w_ih_l0': u(ks[0], (3 * hidden_size, input_size)),
        'w_hh_l0': u(ks[1], (3 * hidden_size, hidden_size)),
        'b_ih_l0': u(ks[2], (3 * hidden_size,)),
        'b_hh_l0': u(ks[3], (3 * hidden_size,)),
        'w_dec':   u(ks[4], (output_size, hidden_size)),
        'b_dec':   u(ks[5], (output_size,)),
    }


def string_to_tensor(s):
    """One-hot (len(s), 1, N_CHARACTERS) float32, same as the PyTorch helper."""
    t = jnp.zeros((len(s), 1, N_CHARACTERS), jnp.float32)
    for i, ch in enumerate(s):
        idx = CHAR_TO_IDX.get(ch, CHAR_TO_IDX[' '])
        t = t.at[i, 0, idx].set(1.0)
    return t


# --------------------------- pure-JAX reference ----------------------------- #
def char_rnn_reference(x, h0, params):
    H = params['w_hh_l0'].shape[1]
    h = h0[0]
    for t in range(x.shape[0]):
        gi = x[t] @ params['w_ih_l0'].T + params['b_ih_l0']
        gh = h @ params['w_hh_l0'].T + params['b_hh_l0']
        r = jax.nn.sigmoid(gi[:, :H] + gh[:, :H])
        z = jax.nn.sigmoid(gi[:, H:2 * H] + gh[:, H:2 * H])
        n = jnp.tanh(gi[:, 2 * H:] + r * gh[:, 2 * H:])
        h = (1.0 - z) * n + z * h
    logits = h @ params['w_dec'].T + params['b_dec']
    return jax.nn.log_softmax(logits, axis=1), h[None]


if __name__ == "__main__":
    key = jax.random.PRNGKey(0)
    params = init_params(key, N_CHARACTERS, N_HIDDEN, N_CHARACTERS)

    x = string_to_tensor("hello")                          # (5, 1, 27)
    h0 = jnp.zeros((N_LAYERS, 1, N_HIDDEN), jnp.float32)   # init_hidden()

    logp, hidden = char_rnn_forward(x, h0, params)
    jax.block_until_ready((logp, hidden))

    ref_logp, ref_hidden = char_rnn_reference(x, h0, params)
    assert logp.shape == (1, N_CHARACTERS) and hidden.shape == (1, 1, N_HIDDEN)
    assert jnp.allclose(logp, ref_logp, rtol=1e-4, atol=1e-4)
    assert jnp.allclose(hidden, ref_hidden, rtol=1e-4, atol=1e-4)

    print("KERNEL_OK")
</pallas_src>

<mosaic_0001>
module attributes {stable_mosaic.version = 11 : i64} {
  func.func @char_rnn_kernel(%arg0: memref<5xi32, #tpu.memory_space<smem>>, %arg1: memref<1x128xf32, #tpu.memory_space<vmem>>, %arg2: memref<32x384xf32, #tpu.memory_space<vmem>>, %arg3: memref<128x384xf32, #tpu.memory_space<vmem>>, %arg4: memref<1x128xf32, #tpu.memory_space<vmem>>, %arg5: memref<128x128xf32, #tpu.memory_space<vmem>>, %arg6: memref<1x128xf32, #tpu.memory_space<vmem>>, %arg7: memref<1x128xf32, #tpu.memory_space<vmem>>, %arg8: memref<1x128xf32, #tpu.memory_space<vmem>>) attributes {dimension_semantics = [], scalar_prefetch = 0 : i64, scratch_operands = 0 : i64, tpu.core_type = #tpu.core_type<tc>} {
    %c0 = arith.constant 0 : index
    %c0_0 = arith.constant 0 : index
    %0 = vector.load %arg3[%c0, %c0_0] : memref<128x384xf32, #tpu.memory_space<vmem>>, vector<128x384xf32>
    %c0_1 = arith.constant 0 : index
    %c0_2 = arith.constant 0 : index
    %1 = vector.load %arg4[%c0_1, %c0_2] : memref<1x128xf32, #tpu.memory_space<vmem>>, vector<1x128xf32>
    %c0_3 = arith.constant 0 : index
    %c0_4 = arith.constant 0 : index
    %2 = vector.load %arg1[%c0_3, %c0_4] : memref<1x128xf32, #tpu.memory_space<vmem>>, vector<1x128xf32>
    %c0_i32 = arith.constant 0 : i32
    %c1_i32 = arith.constant 1 : i32
    %3 = arith.muli %c0_i32, %c1_i32 : i32
    %c0_i32_5 = arith.constant 0 : i32
    %4 = arith.addi %3, %c0_i32_5 : i32
    %5 = arith.index_cast %4 : i32 to index
    %6 = memref.load %arg0[%5] : memref<5xi32, #tpu.memory_space<smem>>
    %7 = arith.index_cast %6 : i32 to index
    %c0_6 = arith.constant 0 : index
    %8 = vector.load %arg2[%7, %c0_6] : memref<32x384xf32, #tpu.memory_space<vmem>>, vector<1x384xf32>
    %cst = arith.constant dense<0.000000e+00> : vector<1x384xf32>
    %9 = tpu.matmul %2, %0, %cst {dimension_numbers = #tpu.dot_dimension_numbers<[1], [0], [0], [1], [0, 0, 1, 1], [], []>} : vector<1x128xf32>, vector<128x384xf32>, vector<1x384xf32> -> vector<1x384xf32>
    %10 = vector.extract_strided_slice %8 {offsets = [0, 0], sizes = [1, 128], strides = [1, 1]} : vector<1x384xf32> to vector<1x128xf32>
    %11 = vector.extract_strided_slice %9 {offsets = [0, 0], sizes = [1, 128], strides = [1, 1]} : vector<1x384xf32> to vector<1x128xf32>
    %12 = arith.addf %10, %11 : vector<1x128xf32>
    %cst_7 = arith.constant 5.000000e-01 : f32
    %13 = vector.broadcast %cst_7 : f32 to vector<1x128xf32>
    %14 = arith.mulf %13, %12 : vector<1x128xf32>
    %15 = math.tanh %14 : vector<1x128xf32>
    %cst_8 = arith.constant 5.000000e-01 : f32
    %16 = vector.broadcast %cst_8 : f32 to vector<1x128xf32>
    %17 = arith.mulf %16, %15 : vector<1x128xf32>
    %cst_9 = arith.constant 5.000000e-01 : f32
    %18 = vector.broadcast %cst_9 : f32 to vector<1x128xf32>
    %19 = arith.addf %17, %18 : vector<1x128xf32>
    %20 = vector.extract_strided_slice %8 {offsets = [0, 128], sizes = [1, 128], strides = [1, 1]} : vector<1x384xf32> to vector<1x128xf32>
    %21 = vector.extract_strided_slice %9 {offsets = [0, 128], sizes = [1, 128], strides = [1, 1]} : vector<1x384xf32> to vector<1x128xf32>
    %22 = arith.addf %20, %21 : vector<1x128xf32>
    %cst_10 = arith.constant 5.000000e-01 : f32
    %23 = vector.broadcast %cst_10 : f32 to vector<1x128xf32>
    %24 = arith.mulf %23, %22 : vector<1x128xf32>
    %25 = math.tanh %24 : vector<1x128xf32>
    %cst_11 = arith.constant 5.000000e-01 : f32
    %26 = vector.broadcast %cst_11 : f32 to vector<1x128xf32>
    %27 = arith.mulf %26, %25 : vector<1x128xf32>
    %cst_12 = arith.constant 5.000000e-01 : f32
    %28 = vector.broadcast %cst_12 : f32 to vector<1x128xf32>
    %29 = arith.addf %27, %28 : vector<1x128xf32>
    %30 = vector.extract_strided_slice %8 {offsets = [0, 256], sizes = [1, 128], strides = [1, 1]} : vector<1x384xf32> to vector<1x128xf32>
    %31 = vector.extract_strided_slice %9 {offsets = [0, 256], sizes = [1, 128], strides = [1, 1]} : vector<1x384xf32> to vector<1x128xf32>
    %32 = arith.addf %31, %1 : vector<1x128xf32>
    %33 = arith.mulf %19, %32 : vector<1x128xf32>
    %34 = arith.addf %30, %33 : vector<1x128xf32>
    %35 = math.tanh %34 : vector<1x128xf32>
    %cst_13 = arith.constant 1.000000e+00 : f32
    %36 = vector.broadcast %cst_13 : f32 to vector<1x128xf32>
    %37 = arith.subf %36, %29 : vector<1x128xf32>
    %38 = arith.mulf %37, %35 : vector<1x128xf32>
    %39 = arith.mulf %29, %2 : vector<1x128xf32>
    %40 = arith.addf %38, %39 : vector<1x128xf32>
    %c1_i32_14 = arith.constant 1 : i32
    %c1_i32_15 = arith.constant 1 : i32
    %41 = arith.muli %c1_i32_14, %c1_i32_15 : i32
    %c0_i32_16 = arith.constant 0 : i32
    %42 = arith.addi %41, %c0_i32_16 : i32
    %43 = arith.index_cast %42 : i32 to index
    %44 = memref.load %arg0[%43] : memref<5xi32, #tpu.memory_space<smem>>
    %45 = arith.index_cast %44 : i32 to index
    %c0_17 = arith.constant 0 : index
    %46 = vector.load %arg2[%45, %c0_17] : memref<32x384xf32, #tpu.memory_space<vmem>>, vector<1x384xf32>
    %cst_18 = arith.constant dense<0.000000e+00> : vector<1x384xf32>
    %47 = tpu.matmul %40, %0, %cst_18 {dimension_numbers = #tpu.dot_dimension_numbers<[1], [0], [0], [1], [0, 0, 1, 1], [], []>} : vector<1x128xf32>, vector<128x384xf32>, vector<1x384xf32> -> vector<1x384xf32>
    %48 = vector.extract_strided_slice %46 {offsets = [0, 0], sizes = [1, 128], strides = [1, 1]} : vector<1x384xf32> to vector<1x128xf32>
    %49 = vector.extract_strided_slice %47 {offsets = [0, 0], sizes = [1, 128], strides = [1, 1]} : vector<1x384xf32> to vector<1x128xf32>
    %50 = arith.addf %48, %49 : vector<1x128xf32>
    %cst_19 = arith.constant 5.000000e-01 : f32
    %51 = vector.broadcast %cst_19 : f32 to vector<1x128xf32>
    %52 = arith.mulf %51, %50 : vector<1x128xf32>
    %53 = math.tanh %52 : vector<1x128xf32>
    %cst_20 = arith.constant 5.000000e-01 : f32
    %54 = vector.broadcast %cst_20 : f32 to vector<1x128xf32>
    %55 = arith.mulf %54, %53 : vector<1x128xf32>
    %cst_21 = arith.constant 5.000000e-01 : f32
    %56 = vector.broadcast %cst_21 : f32 to vector<1x128xf32>
    %57 = arith.addf %55, %56 : vector<1x128xf32>
    %58 = vector.extract_strided_slice %46 {offsets = [0, 128], sizes = [1, 128], strides = [1, 1]} : vector<1x384xf32> to vector<1x128xf32>
    %59 = vector.extract_strided_slice %47 {offsets = [0, 128], sizes = [1, 128], strides = [1, 1]} : vector<1x384xf32> to vector<1x128xf32>
    %60 = arith.addf %58, %59 : vector<1x128xf32>
    %cst_22 = arith.constant 5.000000e-01 : f32
    %61 = vector.broadcast %cst_22 : f32 to vector<1x128xf32>
    %62 = arith.mulf %61, %60 : vector<1x128xf32>
    %63 = math.tanh %62 : vector<1x128xf32>
    %cst_23 = arith.constant 5.000000e-01 : f32
    %64 = vector.broadcast %cst_23 : f32 to vector<1x128xf32>
    %65 = arith.mulf %64, %63 : vector<1x128xf32>
    %cst_24 = arith.constant 5.000000e-01 : f32
    %66 = vector.broadcast %cst_24 : f32 to vector<1x128xf32>
    %67 = arith.addf %65, %66 : vector<1x128xf32>
    %68 = vector.extract_strided_slice %46 {offsets = [0, 256], sizes = [1, 128], strides = [1, 1]} : vector<1x384xf32> to vector<1x128xf32>
    %69 = vector.extract_strided_slice %47 {offsets = [0, 256], sizes = [1, 128], strides = [1, 1]} : vector<1x384xf32> to vector<1x128xf32>
    %70 = arith.addf %69, %1 : vector<1x128xf32>
    %71 = arith.mulf %57, %70 : vector<1x128xf32>
    %72 = arith.addf %68, %71 : vector<1x128xf32>
    %73 = math.tanh %72 : vector<1x128xf32>
    %cst_25 = arith.constant 1.000000e+00 : f32
    %74 = vector.broadcast %cst_25 : f32 to vector<1x128xf32>
    %75 = arith.subf %74, %67 : vector<1x128xf32>
    %76 = arith.mulf %75, %73 : vector<1x128xf32>
    %77 = arith.mulf %67, %40 : vector<1x128xf32>
    %78 = arith.addf %76, %77 : vector<1x128xf32>
    %c2_i32 = arith.constant 2 : i32
    %c1_i32_26 = arith.constant 1 : i32
    %79 = arith.muli %c2_i32, %c1_i32_26 : i32
    %c0_i32_27 = arith.constant 0 : i32
    %80 = arith.addi %79, %c0_i32_27 : i32
    %81 = arith.index_cast %80 : i32 to index
    %82 = memref.load %arg0[%81] : memref<5xi32, #tpu.memory_space<smem>>
    %83 = arith.index_cast %82 : i32 to index
    %c0_28 = arith.constant 0 : index
    %84 = vector.load %arg2[%83, %c0_28] : memref<32x384xf32, #tpu.memory_space<vmem>>, vector<1x384xf32>
    %cst_29 = arith.constant dense<0.000000e+00> : vector<1x384xf32>
    %85 = tpu.matmul %78, %0, %cst_29 {dimension_numbers = #tpu.dot_dimension_numbers<[1], [0], [0], [1], [0, 0, 1, 1], [], []>} : vector<1x128xf32>, vector<128x384xf32>, vector<1x384xf32> -> vector<1x384xf32>
    %86 = vector.extract_strided_slice %84 {offsets = [0, 0], sizes = [1, 128], strides = [1, 1]} : vector<1x384xf32> to vector<1x128xf32>
    %87 = vector.extract_strided_slice %85 {offsets = [0, 0], sizes = [1, 128], strides = [1, 1]} : vector<1x384xf32> to vector<1x128xf32>
    %88 = arith.addf %86, %87 : vector<1x128xf32>
    %cst_30 = arith.constant 5.000000e-01 : f32
    %89 = vector.broadcast %cst_30 : f32 to vector<1x128xf32>
    %90 = arith.mulf %89, %88 : vector<1x128xf32>
    %91 = math.tanh %90 : vector<1x128xf32>
    %cst_31 = arith.constant 5.000000e-01 : f32
    %92 = vector.broadcast %cst_31 : f32 to vector<1x128xf32>
    %93 = arith.mulf %92, %91 : vector<1x128xf32>
    %cst_32 = arith.constant 5.000000e-01 : f32
    %94 = vector.broadcast %cst_32 : f32 to vector<1x128xf32>
    %95 = arith.addf %93, %94 : vector<1x128xf32>
    %96 = vector.extract_strided_slice %84 {offsets = [0, 128], sizes = [1, 128], strides = [1, 1]} : vector<1x384xf32> to vector<1x128xf32>
    %97 = vector.extract_strided_slice %85 {offsets = [0, 128], sizes = [1, 128], strides = [1, 1]} : vector<1x384xf32> to vector<1x128xf32>
    %98 = arith.addf %96, %97 : vector<1x128xf32>
    %cst_33 = arith.constant 5.000000e-01 : f32
    %99 = vector.broadcast %cst_33 : f32 to vector<1x128xf32>
    %100 = arith.mulf %99, %98 : vector<1x128xf32>
    %101 = math.tanh %100 : vector<1x128xf32>
    %cst_34 = arith.constant 5.000000e-01 : f32
    %102 = vector.broadcast %cst_34 : f32 to vector<1x128xf32>
    %103 = arith.mulf %102, %101 : vector<1x128xf32>
    %cst_35 = arith.constant 5.000000e-01 : f32
    %104 = vector.broadcast %cst_35 : f32 to vector<1x128xf32>
    %105 = arith.addf %103, %104 : vector<1x128xf32>
    %106 = vector.extract_strided_slice %84 {offsets = [0, 256], sizes = [1, 128], strides = [1, 1]} : vector<1x384xf32> to vector<1x128xf32>
    %107 = vector.extract_strided_slice %85 {offsets = [0, 256], sizes = [1, 128], strides = [1, 1]} : vector<1x384xf32> to vector<1x128xf32>
    %108 = arith.addf %107, %1 : vector<1x128xf32>
    %109 = arith.mulf %95, %108 : vector<1x128xf32>
    %110 = arith.addf %106, %109 : vector<1x128xf32>
    %111 = math.tanh %110 : vector<1x128xf32>
    %cst_36 = arith.constant 1.000000e+00 : f32
    %112 = vector.broadcast %cst_36 : f32 to vector<1x128xf32>
    %113 = arith.subf %112, %105 : vector<1x128xf32>
    %114 = arith.mulf %113, %111 : vector<1x128xf32>
    %115 = arith.mulf %105, %78 : vector<1x128xf32>
    %116 = arith.addf %114, %115 : vector<1x128xf32>
    %c3_i32 = arith.constant 3 : i32
    %c1_i32_37 = arith.constant 1 : i32
    %117 = arith.muli %c3_i32, %c1_i32_37 : i32
    %c0_i32_38 = arith.constant 0 : i32
    %118 = arith.addi %117, %c0_i32_38 : i32
    %119 = arith.index_cast %118 : i32 to index
    %120 = memref.load %arg0[%119] : memref<5xi32, #tpu.memory_space<smem>>
    %121 = arith.index_cast %120 : i32 to index
    %c0_39 = arith.constant 0 : index
    %122 = vector.load %arg2[%121, %c0_39] : memref<32x384xf32, #tpu.memory_space<vmem>>, vector<1x384xf32>
    %cst_40 = arith.constant dense<0.000000e+00> : vector<1x384xf32>
    %123 = tpu.matmul %116, %0, %cst_40 {dimension_numbers = #tpu.dot_dimension_numbers<[1], [0], [0], [1], [0, 0, 1, 1], [], []>} : vector<1x128xf32>, vector<128x384xf32>, vector<1x384xf32> -> vector<1x384xf32>
    %124 = vector.extract_strided_slice %122 {offsets = [0, 0], sizes = [1, 128], strides = [1, 1]} : vector<1x384xf32> to vector<1x128xf32>
    %125 = vector.extract_strided_slice %123 {offsets = [0, 0], sizes = [1, 128], strides = [1, 1]} : vector<1x384xf32> to vector<1x128xf32>
    %126 = arith.addf %124, %125 : vector<1x128xf32>
    %cst_41 = arith.constant 5.000000e-01 : f32
    %127 = vector.broadcast %cst_41 : f32 to vector<1x128xf32>
    %128 = arith.mulf %127, %126 : vector<1x128xf32>
    %129 = math.tanh %128 : vector<1x128xf32>
    %cst_42 = arith.constant 5.000000e-01 : f32
    %130 = vector.broadcast %cst_42 : f32 to vector<1x128xf32>
    %131 = arith.mulf %130, %129 : vector<1x128xf32>
    %cst_43 = arith.constant 5.000000e-01 : f32
    %132 = vector.broadcast %cst_43 : f32 to vector<1x128xf32>
    %133 = arith.addf %131, %132 : vector<1x128xf32>
    %134 = vector.extract_strided_slice %122 {offsets = [0, 128], sizes = [1, 128], strides = [1, 1]} : vector<1x384xf32> to vector<1x128xf32>
    %135 = vector.extract_strided_slice %123 {offsets = [0, 128], sizes = [1, 128], strides = [1, 1]} : vector<1x384xf32> to vector<1x128xf32>
    %136 = arith.addf %134, %135 : vector<1x128xf32>
    %cst_44 = arith.constant 5.000000e-01 : f32
    %137 = vector.broadcast %cst_44 : f32 to vector<1x128xf32>
    %138 = arith.mulf %137, %136 : vector<1x128xf32>
    %139 = math.tanh %138 : vector<1x128xf32>
    %cst_45 = arith.constant 5.000000e-01 : f32
    %140 = vector.broadcast %cst_45 : f32 to vector<1x128xf32>
    %141 = arith.mulf %140, %139 : vector<1x128xf32>
    %cst_46 = arith.constant 5.000000e-01 : f32
    %142 = vector.broadcast %cst_46 : f32 to vector<1x128xf32>
    %143 = arith.addf %141, %142 : vector<1x128xf32>
    %144 = vector.extract_strided_slice %122 {offsets = [0, 256], sizes = [1, 128], strides = [1, 1]} : vector<1x384xf32> to vector<1x128xf32>
    %145 = vector.extract_strided_slice %123 {offsets = [0, 256], sizes = [1, 128], strides = [1, 1]} : vector<1x384xf32> to vector<1x128xf32>
    %146 = arith.addf %145, %1 : vector<1x128xf32>
    %147 = arith.mulf %133, %146 : vector<1x128xf32>
    %148 = arith.addf %144, %147 : vector<1x128xf32>
    %149 = math.tanh %148 : vector<1x128xf32>
    %cst_47 = arith.constant 1.000000e+00 : f32
    %150 = vector.broadcast %cst_47 : f32 to vector<1x128xf32>
    %151 = arith.subf %150, %143 : vector<1x128xf32>
    %152 = arith.mulf %151, %149 : vector<1x128xf32>
    %153 = arith.mulf %143, %116 : vector<1x128xf32>
    %154 = arith.addf %152, %153 : vector<1x128xf32>
    %c4_i32 = arith.constant 4 : i32
    %c1_i32_48 = arith.constant 1 : i32
    %155 = arith.muli %c4_i32, %c1_i32_48 : i32
    %c0_i32_49 = arith.constant 0 : i32
    %156 = arith.addi %155, %c0_i32_49 : i32
    %157 = arith.index_cast %156 : i32 to index
    %158 = memref.load %arg0[%157] : memref<5xi32, #tpu.memory_space<smem>>
    %159 = arith.index_cast %158 : i32 to index
    %c0_50 = arith.constant 0 : index
    %160 = vector.load %arg2[%159, %c0_50] : memref<32x384xf32, #tpu.memory_space<vmem>>, vector<1x384xf32>
    %cst_51 = arith.constant dense<0.000000e+00> : vector<1x384xf32>
    %161 = tpu.matmul %154, %0, %cst_51 {dimension_numbers = #tpu.dot_dimension_numbers<[1], [0], [0], [1], [0, 0, 1, 1], [], []>} : vector<1x128xf32>, vector<128x384xf32>, vector<1x384xf32> -> vector<1x384xf32>
    %162 = vector.extract_strided_slice %160 {offsets = [0, 0], sizes = [1, 128], strides = [1, 1]} : vector<1x384xf32> to vector<1x128xf32>
    %163 = vector.extract_strided_slice %161 {offsets = [0, 0], sizes = [1, 128], strides = [1, 1]} : vector<1x384xf32> to vector<1x128xf32>
    %164 = arith.addf %162, %163 : vector<1x128xf32>
    %cst_52 = arith.constant 5.000000e-01 : f32
    %165 = vector.broadcast %cst_52 : f32 to vector<1x128xf32>
    %166 = arith.mulf %165, %164 : vector<1x128xf32>
    %167 = math.tanh %166 : vector<1x128xf32>
    %cst_53 = arith.constant 5.000000e-01 : f32
    %168 = vector.broadcast %cst_53 : f32 to vector<1x128xf32>
    %169 = arith.mulf %168, %167 : vector<1x128xf32>
    %cst_54 = arith.constant 5.000000e-01 : f32
    %170 = vector.broadcast %cst_54 : f32 to vector<1x128xf32>
    %171 = arith.addf %169, %170 : vector<1x128xf32>
    %172 = vector.extract_strided_slice %160 {offsets = [0, 128], sizes = [1, 128], strides = [1, 1]} : vector<1x384xf32> to vector<1x128xf32>
    %173 = vector.extract_strided_slice %161 {offsets = [0, 128], sizes = [1, 128], strides = [1, 1]} : vector<1x384xf32> to vector<1x128xf32>
    %174 = arith.addf %172, %173 : vector<1x128xf32>
    %cst_55 = arith.constant 5.000000e-01 : f32
    %175 = vector.broadcast %cst_55 : f32 to vector<1x128xf32>
    %176 = arith.mulf %175, %174 : vector<1x128xf32>
    %177 = math.tanh %176 : vector<1x128xf32>
    %cst_56 = arith.constant 5.000000e-01 : f32
    %178 = vector.broadcast %cst_56 : f32 to vector<1x128xf32>
    %179 = arith.mulf %178, %177 : vector<1x128xf32>
    %cst_57 = arith.constant 5.000000e-01 : f32
    %180 = vector.broadcast %cst_57 : f32 to vector<1x128xf32>
    %181 = arith.addf %179, %180 : vector<1x128xf32>
    %182 = vector.extract_strided_slice %160 {offsets = [0, 256], sizes = [1, 128], strides = [1, 1]} : vector<1x384xf32> to vector<1x128xf32>
    %183 = vector.extract_strided_slice %161 {offsets = [0, 256], sizes = [1, 128], strides = [1, 1]} : vector<1x384xf32> to vector<1x128xf32>
    %184 = arith.addf %183, %1 : vector<1x128xf32>
    %185 = arith.mulf %171, %184 : vector<1x128xf32>
    %186 = arith.addf %182, %185 : vector<1x128xf32>
    %187 = math.tanh %186 : vector<1x128xf32>
    %cst_58 = arith.constant 1.000000e+00 : f32
    %188 = vector.broadcast %cst_58 : f32 to vector<1x128xf32>
    %189 = arith.subf %188, %181 : vector<1x128xf32>
    %190 = arith.mulf %189, %187 : vector<1x128xf32>
    %191 = arith.mulf %181, %154 : vector<1x128xf32>
    %192 = arith.addf %190, %191 : vector<1x128xf32>
    %c5_i32 = arith.constant 5 : i32
    %c0_59 = arith.constant 0 : index
    %c0_60 = arith.constant 0 : index
    %193 = vector.load %arg5[%c0_59, %c0_60] : memref<128x128xf32, #tpu.memory_space<vmem>>, vector<128x128xf32>
    %cst_61 = arith.constant dense<0.000000e+00> : vector<1x128xf32>
    %194 = tpu.matmul %192, %193, %cst_61 {dimension_numbers = #tpu.dot_dimension_numbers<[1], [0], [0], [1], [0, 0, 1, 1], [], []>} : vector<1x128xf32>, vector<128x128xf32>, vector<1x128xf32> -> vector<1x128xf32>
    %c0_62 = arith.constant 0 : index
    %c0_63 = arith.constant 0 : index
    %195 = vector.load %arg6[%c0_62, %c0_63] : memref<1x128xf32, #tpu.memory_space<vmem>>, vector<1x128xf32>
    %196 = arith.addf %194, %195 : vector<1x128xf32>
    %cst_64 = arith.constant dense<0xFF800000> : vector<1xf32>
    %197 = vector.multi_reduction <maximumf>, %196, %cst_64 [1] : vector<1x128xf32> to vector<1xf32>
    %198 = vector.shape_cast %197 : vector<1xf32> to vector<1x1xf32>
    %199 = vector.broadcast %198 : vector<1x1xf32> to vector<1x128xf32>
    %200 = arith.subf %196, %199 : vector<1x128xf32>
    %201 = math.exp %200 : vector<1x128xf32>
    %cst_65 = arith.constant dense<0.000000e+00> : vector<1xf32>
    %202 = vector.multi_reduction <add>, %201, %cst_65 [1] : vector<1x128xf32> to vector<1xf32>
    %203 = vector.shape_cast %202 : vector<1xf32> to vector<1x1xf32>
    %204 = math.log %203 : vector<1x1xf32>
    %205 = arith.addf %204, %198 : vector<1x1xf32>
    %206 = vector.broadcast %205 : vector<1x1xf32> to vector<1x128xf32>
    %207 = arith.subf %196, %206 : vector<1x128xf32>
    %c0_66 = arith.constant 0 : index
    %c0_67 = arith.constant 0 : index
    %208 = vector.load %arg7[%c0_66, %c0_67] : memref<1x128xf32, #tpu.memory_space<vmem>>, vector<1x128xf32>
    tpu.vector_store %arg7[%c0_66, %c0_67], %207 {strides = array<i32>} : memref<1x128xf32, #tpu.memory_space<vmem>>, vector<1x128xf32>,
    %c0_68 = arith.constant 0 : index
    %c0_69 = arith.constant 0 : index
    %209 = vector.load %arg8[%c0_68, %c0_69] : memref<1x128xf32, #tpu.memory_space<vmem>>, vector<1x128xf32>
    tpu.vector_store %arg8[%c0_68, %c0_69], %192 {strides = array<i32>} : memref<1x128xf32, #tpu.memory_space<vmem>>, vector<1x128xf32>,
    return
  }
}

</mosaic_0001>

<llo_original>
// kernel: tpu_custom_call.1
$region0: #{tpu_custom_call.1}
  #allocation0 [shape = 'u32[]', space=smem, size = 0x4, offset = 0x4, fixed_abs, tag = 'smem constant byte address 0x4 - core index']
  #allocation1 [shape = 'u32[72,128]{1,0:T(1,128)}', space=vmem, size = 0x9000, scoped, tag = 'internal scratch']
  %s0 = inlined_call_operand.hbm [shape: s32[5], index: 0, kind: input, shape index: {}]
  %s1 = inlined_call_operand.hbm [shape: f32[1,128], index: 1, kind: input, shape index: {}]
  %s2 = inlined_call_operand.hbm [shape: f32[32,384], index: 2, kind: input, shape index: {}]
  %s3 = inlined_call_operand.hbm [shape: f32[128,384], index: 3, kind: input, shape index: {}]
  %s4 = inlined_call_operand.vmem [shape: f32[1,128], index: 4, kind: input, shape index: {}]
  %s5 = inlined_call_operand.hbm [shape: f32[128,128], index: 5, kind: input, shape index: {}]
  %s6 = inlined_call_operand.vmem [shape: f32[1,128], index: 6, kind: input, shape index: {}]
  %s7 = inlined_call_operand.hbm [shape: f32[1,128], index: 7, kind: output, shape index: {0}]
  %s8 = inlined_call_operand.hbm [shape: f32[1,128], index: 8, kind: output, shape index: {1}]
  %9 = xla_tuple %s7, %s8
  %s10 = sld [smem:[#allocation0]]
  $region66: #{tpu_custom_call.1} parent=0
    _
  %s12 = ssub.s32 1, %s10
  %s13 = scalar_select 0, %s12, %s10
  $region1: #{tpu_custom_call.1} parent=0
    #allocation2 [shape = 'u8[512]{0}', space=smem, size = 0x200, scoped, tag = 'input window, operand 0, single buffered']
    #allocation3 [shape = 's32[1]{0}', space=sflag, size = 0x4, scoped, tag = 'scoped memory for tpu_custom_call.1']
    #allocation4 [shape = 's32[1]{0}', space=sflag, size = 0x4, scoped, tag = 'scoped memory for tpu_custom_call.1']
    #allocation5 [shape = 's32[1]{0}', space=sflag, size = 0x4, scoped, tag = 'scoped memory for tpu_custom_call.1']
    #allocation6 [shape = 'u8[512]{0}', space=vmem, size = 0x400, scoped, tag = 'input window, operand 1, single buffered']
    #allocation7 [shape = 'u8[49152]{0}', space=vmem, size = 0xc000, scoped, tag = 'input window, operand 2, single buffered']
    #allocation8 [shape = 's32[1]{0}', space=sflag, size = 0x4, scoped, tag = 'scoped memory for tpu_custom_call.1']
    #allocation9 [shape = 'u8[196608]{0}', space=vmem, size = 0x30000, scoped, tag = 'input window, operand 3, single buffered']
    #allocation10 [shape = 'u8[65536]{0}', space=vmem, size = 0x10000, scoped, tag = 'input window, operand 5, single buffered']
    #allocation11 [shape = 's32[1]{0}', space=sflag, size = 0x4, scoped, tag = 'scoped memory for tpu_custom_call.1']
    #allocation12 [shape = 'u8[512]{0}', space=vmem, size = 0x400, scoped, tag = 'output window, operand 0, single buffered']
    #allocation13 [shape = 'u8[512]{0}', space=vmem, size = 0x400, scoped, tag = 'output window, operand 1, single buffered']
    #allocation14 [shape = 's32[1]{0}', space=sflag, size = 0x4, scoped, tag = 'scoped memory for tpu_custom_call.1']
    %14 = vsyncpa [#allocation5], 0
    %15 = vsyncpa [#allocation3], 0
    %16 = vsyncpa [#allocation8], 0
    %17 = vsyncpa [#allocation11], 0
    %18 = vsyncpa [#allocation4], 0
    %19 = vsyncpa [#allocation14], 0
    // Predicated region
    $region2: #{tpu_custom_call.1} parent=1 // pred_check
      _
    $region3: #{tpu_custom_call.1} parent=1 // pred_check_branch
      %21 = sbr.rel (0) target = $region5
    $region4: #{tpu_custom_call.1} parent=1 // pred_region
      %23 = vsyncadd [#allocation5], 0
      %s25 = sshll.u32 %s0, 4
      %s26 = int_to_ptr.hbm [resolvable:$true] %s25
      %28 = dma.hbm_to_smem %s26, 16, [#allocation2], [#allocation5]
    $region5: #{tpu_custom_call.1} parent=1 // pred_fallthru
      _
    // Predicated region
    $region6: #{tpu_custom_call.1} parent=1 // pred_check
      _
    $region7: #{tpu_custom_call.1} parent=1 // pred_check_branch
      %30 = sbr.rel (0) target = $region9
    $region8: #{tpu_custom_call.1} parent=1 // pred_region
      %32 = vsyncadd [#allocation3], 0
      %s34 = sshll.u32 %s1, 4
      %s35 = int_to_ptr.hbm [resolvable:$true] %s34
      %s36 = sshll.u32 [#allocation6], 4
      %s37 = int_to_ptr.vmem [resolvable:$true] %s36
      %39 = dma.hbm_to_vmem [thread:$0]  %s35, 16, %s37, [#allocation3]
    $region9: #{tpu_custom_call.1} parent=1 // pred_fallthru
      _
    // Predicated region
    $region10: #{tpu_custom_call.1} parent=1 // pred_check
      _
    $region11: #{tpu_custom_call.1} parent=1 // pred_check_branch
      %41 = sbr.rel (0) target = $region13
    $region12: #{tpu_custom_call.1} parent=1 // pred_region
      %43 = vsyncadd [#allocation8], 0
      %s44 = sshll.u32 %s2, 4
      %s45 = int_to_ptr.hbm [resolvable:$true] %s44
      %s46 = sshll.u32 [#allocation7], 4
      %s47 = int_to_ptr.vmem [resolvable:$true] %s46
      %52 = dma.hbm_to_vmem [thread:$0]  %s45, 1536, %s47, [#allocation8], 384, 384, 24
    $region13: #{tpu_custom_call.1} parent=1 // pred_fallthru
      _
    // Predicated region
    $region14: #{tpu_custom_call.1} parent=1 // pred_check
      _
    $region15: #{tpu_custom_call.1} parent=1 // pred_check_branch
      %54 = sbr.rel (0) target = $region17
    $region16: #{tpu_custom_call.1} parent=1 // pred_region
      %56 = vsyncadd [#allocation8], 0
      %s57 = sshll.u32 %s3, 4
      %s58 = int_to_ptr.hbm [resolvable:$true] %s57
      %s59 = sshll.u32 [#allocation9], 4
      %s60 = int_to_ptr.vmem [resolvable:$true] %s59
      %65 = dma.hbm_to_vmem [thread:$0]  %s58, 6144, %s60, [#allocation8], 384, 384, 24
    $region17: #{tpu_custom_call.1} parent=1 // pred_fallthru
      _
    // Predicated region
    $region18: #{tpu_custom_call.1} parent=1 // pred_check
      _
    $region19: #{tpu_custom_call.1} parent=1 // pred_check_branch
      %67 = sbr.rel (0) target = $region21
    $region20: #{tpu_custom_call.1} parent=1 // pred_region
      _
    $region21: #{tpu_custom_call.1} parent=1 // pred_fallthru
      _
    // Predicated region
    $region22: #{tpu_custom_call.1} parent=1 // pred_check
      _
    $region23: #{tpu_custom_call.1} parent=1 // pred_check_branch
      %69 = sbr.rel (0) target = $region25
    $region24: #{tpu_custom_call.1} parent=1 // pred_region
      %71 = vsyncadd [#allocation11], 0
      %s72 = sshll.u32 %s5, 4
      %s73 = int_to_ptr.hbm [resolvable:$true] %s72
      %s74 = sshll.u32 [#allocation10], 4
      %s75 = int_to_ptr.vmem [resolvable:$true] %s74
      %80 = dma.hbm_to_vmem [thread:$0]  %s73, 2048, %s75, [#allocation11], 128, 128, 8
    $region25: #{tpu_custom_call.1} parent=1 // pred_fallthru
      _
    // Predicated region
    $region26: #{tpu_custom_call.1} parent=1 // pred_check
      _
    $region27: #{tpu_custom_call.1} parent=1 // pred_check_branch
      %82 = sbr.rel (0) target = $region29
    $region28: #{tpu_custom_call.1} parent=1 // pred_region
      _
    $region29: #{tpu_custom_call.1} parent=1 // pred_fallthru
      _
    // Predicated region
    $region30: #{tpu_custom_call.1} parent=1 // pred_check
      _
    $region31: #{tpu_custom_call.1} parent=1 // pred_check_branch
      %84 = sbr.rel (0) target = $region33
    $region32: #{tpu_custom_call.1} parent=1 // pred_region
      %86 = dma.done [#allocation5], 16
    $region33: #{tpu_custom_call.1} parent=1 // pred_fallthru
      _
    // Predicated region
    $region34: #{tpu_custom_call.1} parent=1 // pred_check
      _
    $region35: #{tpu_custom_call.1} parent=1 // pred_check_branch
      %88 = sbr.rel (0) target = $region37
    $region36: #{tpu_custom_call.1} parent=1 // pred_region
      %90 = dma.done [#allocation3], 16
    $region37: #{tpu_custom_call.1} parent=1 // pred_fallthru
      _
    // Predicated region
    $region38: #{tpu_custom_call.1} parent=1 // pred_check
      _
    $region39: #{tpu_custom_call.1} parent=1 // pred_check_branch
      %92 = sbr.rel (0) target = $region41
    $region40: #{tpu_custom_call.1} parent=1 // pred_region
      %94 = dma.done [#allocation8], 1536
    $region41: #{tpu_custom_call.1} parent=1 // pred_fallthru
      _
    // Predicated region
    $region42: #{tpu_custom_call.1} parent=1 // pred_check
      _
    $region43: #{tpu_custom_call.1} parent=1 // pred_check_branch
      %96 = sbr.rel (0) target = $region45
    $region44: #{tpu_custom_call.1} parent=1 // pred_region
      %98 = dma.done [#allocation8], 6144
    $region45: #{tpu_custom_call.1} parent=1 // pred_fallthru
      _
    // Predicated region
    $region46: #{tpu_custom_call.1} parent=1 // pred_check
      _
    $region47: #{tpu_custom_call.1} parent=1 // pred_check_branch
      %100 = sbr.rel (0) target = $region49
    $region48: #{tpu_custom_call.1} parent=1 // pred_region
      %102 = dma.done [#allocation11], 2048
    $region49: #{tpu_custom_call.1} parent=1 // pred_fallthru
      _
    %103 = sfence
    %v104 = vld [vmem:[#allocation9] sm:$0xff]
    %v105 = vld [vmem:[#allocation9 + $0x8] sm:$0xff]
    %v106 = vld [vmem:[#allocation9 + $0x10] sm:$0xff]
    %v107 = vld [vmem:[#allocation9 + $0x18] sm:$0xff]
    %v108 = vld [vmem:[#allocation9 + $0x20] sm:$0xff]
    %v109 = vld [vmem:[#allocation9 + $0x28] sm:$0xff]
    %v110 = vld [vmem:[#allocation9 + $0x30] sm:$0xff]
    %v111 = vld [vmem:[#allocation9 + $0x38] sm:$0xff]
    %v112 = vld [vmem:[#allocation9 + $0x40] sm:$0xff]
    %v113 = vld [vmem:[#allocation9 + $0x48] sm:$0xff]
    %v114 = vld [vmem:[#allocation9 + $0x50] sm:$0xff]
    %v115 = vld [vmem:[#allocation9 + $0x58] sm:$0xff]
    %v116 = vld [vmem:[#allocation9 + $0x60] sm:$0xff]
    %v117 = vld [vmem:[#allocation9 + $0x68] sm:$0xff]
    %v118 = vld [vmem:[#allocation9 + $0x70] sm:$0xff]
    %v119 = vld [vmem:[#allocation9 + $0x78] sm:$0xff]
    %v120 = vld [vmem:[#allocation9 + $0x80] sm:$0xff]
    %v121 = vld [vmem:[#allocation9 + $0x88] sm:$0xff]
    %v122 = vld [vmem:[#allocation9 + $0x90] sm:$0xff]
    %v123 = vld [vmem:[#allocation9 + $0x98] sm:$0xff]
    %v124 = vld [vmem:[#allocation9 + $0xa0] sm:$0xff]
    %v125 = vld [vmem:[#allocation9 + $0xa8] sm:$0xff]
    %v126 = vld [vmem:[#allocation9 + $0xb0] sm:$0xff]
    %v127 = vld [vmem:[#allocation9 + $0xb8] sm:$0xff]
    %v128 = vld [vmem:[#allocation9 + $0xc0] sm:$0xff]
    %v129 = vld [vmem:[#allocation9 + $0xc8] sm:$0xff]
    %v130 = vld [vmem:[#allocation9 + $0xd0] sm:$0xff]
    %v131 = vld [vmem:[#allocation9 + $0xd8] sm:$0xff]
    %v132 = vld [vmem:[#allocation9 + $0xe0] sm:$0xff]
    %v133 = vld [vmem:[#allocation9 + $0xe8] sm:$0xff]
    %v134 = vld [vmem:[#allocation9 + $0xf0] sm:$0xff]
    %v135 = vld [vmem:[#allocation9 + $0xf8] sm:$0xff]
    %v136 = vld [vmem:[#allocation9 + $0x100] sm:$0xff]
    %v137 = vld [vmem:[#allocation9 + $0x108] sm:$0xff]
    %v138 = vld [vmem:[#allocation9 + $0x110] sm:$0xff]
    %v139 = vld [vmem:[#allocation9 + $0x118] sm:$0xff]
    %v140 = vld [vmem:[#allocation9 + $0x120] sm:$0xff]
    %v141 = vld [vmem:[#allocation9 + $0x128] sm:$0xff]
    %v142 = vld [vmem:[#allocation9 + $0x130] sm:$0xff]
    %v143 = vld [vmem:[#allocation9 + $0x138] sm:$0xff]
    %v144 = vld [vmem:[#allocation9 + $0x140] sm:$0xff]
    %v145 = vld [vmem:[#allocation9 + $0x148] sm:$0xff]
    %v146 = vld [vmem:[#allocation9 + $0x150] sm:$0xff]
    %v147 = vld [vmem:[#allocation9 + $0x158] sm:$0xff]
    %v148 = vld [vmem:[#allocation9 + $0x160] sm:$0xff]
    %v149 = vld [vmem:[#allocation9 + $0x168] sm:$0xff]
    %v150 = vld [vmem:[#allocation9 + $0x170] sm:$0xff]
    %v151 = vld [vmem:[#allocation9 + $0x178] sm:$0xff]
    %v152 = vld [vmem:[%s4] sm:$0x1]
    %v153 = vld [vmem:[#allocation6] sm:$0x1]
    %s154 = sld [smem:[#allocation2]]
    %s155 = sshra.s32 %s154, 3
    %s156 = sand.u32 %s154, 7
    %s157 = sshra.s32 %s154, 3
    %s158 = sand.u32 %s154, 7
    %s159 = smul.u32 %s155, 3
    %s160 = smul.u32 %s159, 8
    %s161 = sadd.s32 %s160, %s158
    %s162 = scalar_lea.vmem [#allocation7], %s161
    %v163 = vld [vmem:[%s162] ss:$8 sm:$0x7]
    %164 = vmatpush.msra.mxu0 %v149
    %165 = vmatpush.msra.mxu0 %v146
    %166 = vmatpush.msra.mxu0 %v143
    %167 = vmatpush.msra.mxu0 %v140
    %168 = vmatpush.msra.mxu0 %v137
    %169 = vmatpush.msra.mxu0 %v134
    %170 = vmatpush.msra.mxu0 %v131
    %171 = vmatpush.msra.mxu0 %v128
    %172 = vmatpush.msra.mxu0 %v125
    %173 = vmatpush.msra.mxu0 %v122
    %174 = vmatpush.msra.mxu0 %v119
    %175 = vmatpush.msra.mxu0 %v116
    %176 = vmatpush.msra.mxu0 %v113
    %177 = vmatpush.msra.mxu0 %v110
    %178 = vmatpush.msra.mxu0 %v107
    %179 = vmatpush.msra.mxu0 %v104
    %180 = vmatmul.f32.gmra.mxu0 %v153
    %v181 = vpop.f32.mrf.mxu0
    %v182 = vadd.f32 0.0, %v181
    %183 = vdwg.mxu0
    %184 = vmatpush.msra.mxu0 %v150
    %185 = vmatpush.msra.mxu0 %v147
    %186 = vmatpush.msra.mxu0 %v144
    %187 = vmatpush.msra.mxu0 %v141
    %188 = vmatpush.msra.mxu0 %v138
    %189 = vmatpush.msra.mxu0 %v135
    %190 = vmatpush.msra.mxu0 %v132
    %191 = vmatpush.msra.mxu0 %v129
    %192 = vmatpush.msra.mxu0 %v126
    %193 = vmatpush.msra.mxu0 %v123
    %194 = vmatpush.msra.mxu0 %v120
    %195 = vmatpush.msra.mxu0 %v117
    %196 = vmatpush.msra.mxu0 %v114
    %197 = vmatpush.msra.mxu0 %v111
    %198 = vmatpush.msra.mxu0 %v108
    %199 = vmatpush.msra.mxu0 %v105
    %200 = vmatmul.f32.gmra.mxu0 %v153
    %v201 = vpop.f32.mrf.mxu0
    %v202 = vadd.f32 0.0, %v201
    %203 = vdwg.mxu0
    %204 = vmatpush.msra.mxu0 %v151
    %205 = vmatpush.msra.mxu0 %v148
    %206 = vmatpush.msra.mxu0 %v145
    %207 = vmatpush.msra.mxu0 %v142
    %208 = vmatpush.msra.mxu0 %v139
    %209 = vmatpush.msra.mxu0 %v136
    %210 = vmatpush.msra.mxu0 %v133
    %211 = vmatpush.msra.mxu0 %v130
    %212 = vmatpush.msra.mxu0 %v127
    %213 = vmatpush.msra.mxu0 %v124
    %214 = vmatpush.msra.mxu0 %v121
    %215 = vmatpush.msra.mxu0 %v118
    %216 = vmatpush.msra.mxu0 %v115
    %217 = vmatpush.msra.mxu0 %v112
    %218 = vmatpush.msra.mxu0 %v109
    %219 = vmatpush.msra.mxu0 %v106
    %220 = vmatmul.f32.gmra.mxu0 %v153
    %v221 = vpop.f32.mrf.mxu0
    %v222 = vadd.f32 0.0, %v221
    %223 = vdwg.mxu0
    %v224 = vadd.f32 %v163, %v182
    %v225 = vmul.f32 %v224, 0.5
    %v226 = vtanh.pop %v225
    %v227 = vmul.f32 %v226, 0.5
    %v228 = vadd.f32 %v227, 0.5
    %v230 = vrot.slane %v163, 1
    %v232 = vadd.f32 %v230, %v202
    %v233 = vmul.f32 %v232, 0.5
    %v234 = vtanh.pop %v233
    %v235 = vmul.f32 %v234, 0.5
    %v236 = vadd.f32 %v235, 0.5
    %v237 = vadd.f32 %v222, %v152
    %v238 = vmul.f32 %v228, %v237
    %v239 = vrot.slane %v163, 2
    %v241 = vadd.f32 %v239, %v238
    %v242 = vtanh.pop %v241
    %v243 = vsub.f32 1.0, %v236
    %v244 = vmul.f32 %v243, %v242
    %v245 = vmul.f32 %v236, %v153
    %v246 = vadd.f32 %v244, %v245
    %s247 = sld [smem:[#allocation2 + $0x1]]
    %s248 = sshra.s32 %s247, 3
    %s249 = sand.u32 %s247, 7
    %s250 = sshra.s32 %s247, 3
    %s251 = sand.u32 %s247, 7
    %s252 = smul.u32 %s248, 3
    %s253 = smul.u32 %s252, 8
    %s254 = sadd.s32 %s253, %s251
    %s255 = scalar_lea.vmem [#allocation7], %s254
    %v256 = vld [vmem:[%s255] ss:$8 sm:$0x7]
    %257 = vmatpush.msra.mxu0 %v149
    %258 = vmatpush.msra.mxu0 %v146
    %259 = vmatpush.msra.mxu0 %v143
    %260 = vmatpush.msra.mxu0 %v140
    %261 = vmatpush.msra.mxu0 %v137
    %262 = vmatpush.msra.mxu0 %v134
    %263 = vmatpush.msra.mxu0 %v131
    %264 = vmatpush.msra.mxu0 %v128
    %265 = vmatpush.msra.mxu0 %v125
    %266 = vmatpush.msra.mxu0 %v122
    %267 = vmatpush.msra.mxu0 %v119
    %268 = vmatpush.msra.mxu0 %v116
    %269 = vmatpush.msra.mxu0 %v113
    %270 = vmatpush.msra.mxu0 %v110
    %271 = vmatpush.msra.mxu0 %v107
    %272 = vmatpush.msra.mxu0 %v104
    %273 = vmatmul.f32.gmra.mxu0 %v246
    %v274 = vpop.f32.mrf.mxu0
    %v275 = vadd.f32 0.0, %v274
    %276 = vdwg.mxu0
    %277 = vmatpush.msra.mxu0 %v150
    %278 = vmatpush.msra.mxu0 %v147
    %279 = vmatpush.msra.mxu0 %v144
    %280 = vmatpush.msra.mxu0 %v141
    %281 = vmatpush.msra.mxu0 %v138
    %282 = vmatpush.msra.mxu0 %v135
    %283 = vmatpush.msra.mxu0 %v132
    %284 = vmatpush.msra.mxu0 %v129
    %285 = vmatpush.msra.mxu0 %v126
    %286 = vmatpush.msra.mxu0 %v123
    %287 = vmatpush.msra.mxu0 %v120
    %288 = vmatpush.msra.mxu0 %v117
    %289 = vmatpush.msra.mxu0 %v114
    %290 = vmatpush.msra.mxu0 %v111
    %291 = vmatpush.msra.mxu0 %v108
    %292 = vmatpush.msra.mxu0 %v105
    %293 = vmatmul.f32.gmra.mxu0 %v246
    %v294 = vpop.f32.mrf.mxu0
    %v295 = vadd.f32 0.0, %v294
    %296 = vdwg.mxu0
    %297 = vmatpush.msra.mxu0 %v151
    %298 = vmatpush.msra.mxu0 %v148
    %299 = vmatpush.msra.mxu0 %v145
    %300 = vmatpush.msra.mxu0 %v142
    %301 = vmatpush.msra.mxu0 %v139
    %302 = vmatpush.msra.mxu0 %v136
    %303 = vmatpush.msra.mxu0 %v133
    %304 = vmatpush.msra.mxu0 %v130
    %305 = vmatpush.msra.mxu0 %v127
    %306 = vmatpush.msra.mxu0 %v124
    %307 = vmatpush.msra.mxu0 %v121
    %308 = vmatpush.msra.mxu0 %v118
    %309 = vmatpush.msra.mxu0 %v115
    %310 = vmatpush.msra.mxu0 %v112
    %311 = vmatpush.msra.mxu0 %v109
    %312 = vmatpush.msra.mxu0 %v106
    %313 = vmatmul.f32.gmra.mxu0 %v246
    %v314 = vpop.f32.mrf.mxu0
    %v315 = vadd.f32 0.0, %v314
    %316 = vdwg.mxu0
    %v317 = vadd.f32 %v256, %v275
    %v318 = vmul.f32 %v317, 0.5
    %v319 = vtanh.pop %v318
    %v320 = vmul.f32 %v319, 0.5
    %v321 = vadd.f32 %v320, 0.5
    %v323 = vrot.slane %v256, 1
    %v325 = vadd.f32 %v323, %v295
    %v326 = vmul.f32 %v325, 0.5
    %v327 = vtanh.pop %v326
    %v328 = vmul.f32 %v327, 0.5
    %v329 = vadd.f32 %v328, 0.5
    %v330 = vadd.f32 %v315, %v152
    %v331 = vmul.f32 %v321, %v330
    %v332 = vrot.slane %v256, 2
    %v334 = vadd.f32 %v332, %v331
    %v335 = vtanh.pop %v334
    %v336 = vsub.f32 1.0, %v329
    %v337 = vmul.f32 %v336, %v335
    %v338 = vmul.f32 %v329, %v246
    %v339 = vadd.f32 %v337, %v338
    %s340 = sld [smem:[#allocation2 + $0x2]]
    %s341 = sshra.s32 %s340, 3
    %s342 = sand.u32 %s340, 7
    %s343 = sshra.s32 %s340, 3
    %s344 = sand.u32 %s340, 7
    %s345 = smul.u32 %s341, 3
    %s346 = smul.u32 %s345, 8
    %s347 = sadd.s32 %s346, %s344
    %s348 = scalar_lea.vmem [#allocation7], %s347
    %v349 = vld [vmem:[%s348] ss:$8 sm:$0x7]
    %350 = vmatpush.msra.mxu0 %v149
    %351 = vmatpush.msra.mxu0 %v146
    %352 = vmatpush.msra.mxu0 %v143
    %353 = vmatpush.msra.mxu0 %v140
    %354 = vmatpush.msra.mxu0 %v137
    %355 = vmatpush.msra.mxu0 %v134
    %356 = vmatpush.msra.mxu0 %v131
    %357 = vmatpush.msra.mxu0 %v128
    %358 = vmatpush.msra.mxu0 %v125
    %359 = vmatpush.msra.mxu0 %v122
    %360 = vmatpush.msra.mxu0 %v119
    %361 = vmatpush.msra.mxu0 %v116
    %362 = vmatpush.msra.mxu0 %v113
    %363 = vmatpush.msra.mxu0 %v110
    %364 = vmatpush.msra.mxu0 %v107
    %365 = vmatpush.msra.mxu0 %v104
    %366 = vmatmul.f32.gmra.mxu0 %v339
    %v367 = vpop.f32.mrf.mxu0
    %v368 = vadd.f32 0.0, %v367
    %369 = vdwg.mxu0
    %370 = vmatpush.msra.mxu0 %v150
    %371 = vmatpush.msra.mxu0 %v147
    %372 = vmatpush.msra.mxu0 %v144
    %373 = vmatpush.msra.mxu0 %v141
    %374 = vmatpush.msra.mxu0 %v138
    %375 = vmatpush.msra.mxu0 %v135
    %376 = vmatpush.msra.mxu0 %v132
    %377 = vmatpush.msra.mxu0 %v129
    %378 = vmatpush.msra.mxu0 %v126
    %379 = vmatpush.msra.mxu0 %v123
    %380 = vmatpush.msra.mxu0 %v120
    %381 = vmatpush.msra.mxu0 %v117
    %382 = vmatpush.msra.mxu0 %v114
    %383 = vmatpush.msra.mxu0 %v111
    %384 = vmatpush.msra.mxu0 %v108
    %385 = vmatpush.msra.mxu0 %v105
    %386 = vmatmul.f32.gmra.mxu0 %v339
    %v387 = vpop.f32.mrf.mxu0
    %v388 = vadd.f32 0.0, %v387
    %389 = vdwg.mxu0
    %390 = vmatpush.msra.mxu0 %v151
    %391 = vmatpush.msra.mxu0 %v148
    %392 = vmatpush.msra.mxu0 %v145
    %393 = vmatpush.msra.mxu0 %v142
    %394 = vmatpush.msra.mxu0 %v139
    %395 = vmatpush.msra.mxu0 %v136
    %396 = vmatpush.msra.mxu0 %v133
    %397 = vmatpush.msra.mxu0 %v130
    %398 = vmatpush.msra.mxu0 %v127
    %399 = vmatpush.msra.mxu0 %v124
    %400 = vmatpush.msra.mxu0 %v121
    %401 = vmatpush.msra.mxu0 %v118
    %402 = vmatpush.msra.mxu0 %v115
    %403 = vmatpush.msra.mxu0 %v112
    %404 = vmatpush.msra.mxu0 %v109
    %405 = vmatpush.msra.mxu0 %v106
    %406 = vmatmul.f32.gmra.mxu0 %v339
    %v407 = vpop.f32.mrf.mxu0
    %v408 = vadd.f32 0.0, %v407
    %409 = vdwg.mxu0
    %v410 = vadd.f32 %v349, %v368
    %v411 = vmul.f32 %v410, 0.5
    %v412 = vtanh.pop %v411
    %v413 = vmul.f32 %v412, 0.5
    %v414 = vadd.f32 %v413, 0.5
    %v416 = vrot.slane %v349, 1
    %v418 = vadd.f32 %v416, %v388
    %v419 = vmul.f32 %v418, 0.5
    %v420 = vtanh.pop %v419
    %v421 = vmul.f32 %v420, 0.5
    %v422 = vadd.f32 %v421, 0.5
    %v423 = vadd.f32 %v408, %v152
    %v424 = vmul.f32 %v414, %v423
    %v425 = vrot.slane %v349, 2
    %v427 = vadd.f32 %v425, %v424
    %v428 = vtanh.pop %v427
    %v429 = vsub.f32 1.0, %v422
    %v430 = vmul.f32 %v429, %v428
    %v431 = vmul.f32 %v422, %v339
    %v432 = vadd.f32 %v430, %v431
    %s433 = sld [smem:[#allocation2 + $0x3]]
    %s434 = sshra.s32 %s433, 3
    %s435 = sand.u32 %s433, 7
    %s436 = sshra.s32 %s433, 3
    %s437 = sand.u32 %s433, 7
    %s438 = smul.u32 %s434, 3
    %s439 = smul.u32 %s438, 8
    %s440 = sadd.s32 %s439, %s437
    %s441 = scalar_lea.vmem [#allocation7], %s440
    %v442 = vld [vmem:[%s441] ss:$8 sm:$0x7]
    %443 = vmatpush.msra.mxu0 %v149
    %444 = vmatpush.msra.mxu0 %v146
    %445 = vmatpush.msra.mxu0 %v143
    %446 = vmatpush.msra.mxu0 %v140
    %447 = vmatpush.msra.mxu0 %v137
    %448 = vmatpush.msra.mxu0 %v134
    %449 = vmatpush.msra.mxu0 %v131
    %450 = vmatpush.msra.mxu0 %v128
    %451 = vmatpush.msra.mxu0 %v125
    %452 = vmatpush.msra.mxu0 %v122
    %453 = vmatpush.msra.mxu0 %v119
    %454 = vmatpush.msra.mxu0 %v116
    %455 = vmatpush.msra.mxu0 %v113
    %456 = vmatpush.msra.mxu0 %v110
    %457 = vmatpush.msra.mxu0 %v107
    %458 = vmatpush.msra.mxu0 %v104
    %459 = vmatmul.f32.gmra.mxu0 %v432
    %v460 = vpop.f32.mrf.mxu0
    %v461 = vadd.f32 0.0, %v460
    %462 = vdwg.mxu0
    %463 = vmatpush.msra.mxu0 %v150
    %464 = vmatpush.msra.mxu0 %v147
    %465 = vmatpush.msra.mxu0 %v144
    %466 = vmatpush.msra.mxu0 %v141
    %467 = vmatpush.msra.mxu0 %v138
    %468 = vmatpush.msra.mxu0 %v135
    %469 = vmatpush.msra.mxu0 %v132
    %470 = vmatpush.msra.mxu0 %v129
    %471 = vmatpush.msra.mxu0 %v126
    %472 = vmatpush.msra.mxu0 %v123
    %473 = vmatpush.msra.mxu0 %v120
    %474 = vmatpush.msra.mxu0 %v117
    %475 = vmatpush.msra.mxu0 %v114
    %476 = vmatpush.msra.mxu0 %v111
    %477 = vmatpush.msra.mxu0 %v108
    %478 = vmatpush.msra.mxu0 %v105
    %479 = vmatmul.f32.gmra.mxu0 %v432
    %v480 = vpop.f32.mrf.mxu0
    %v481 = vadd.f32 0.0, %v480
    %482 = vdwg.mxu0
    %483 = vmatpush.msra.mxu0 %v151
    %484 = vmatpush.msra.mxu0 %v148
    %485 = vmatpush.msra.mxu0 %v145
    %486 = vmatpush.msra.mxu0 %v142
    %487 = vmatpush.msra.mxu0 %v139
    %488 = vmatpush.msra.mxu0 %v136
    %489 = vmatpush.msra.mxu0 %v133
    %490 = vmatpush.msra.mxu0 %v130
    %491 = vmatpush.msra.mxu0 %v127
    %492 = vmatpush.msra.mxu0 %v124
    %493 = vmatpush.msra.mxu0 %v121
    %494 = vmatpush.msra.mxu0 %v118
    %495 = vmatpush.msra.mxu0 %v115
    %496 = vmatpush.msra.mxu0 %v112
    %497 = vmatpush.msra.mxu0 %v109
    %498 = vmatpush.msra.mxu0 %v106
    %499 = vmatmul.f32.gmra.mxu0 %v432
    %v500 = vpop.f32.mrf.mxu0
    %v501 = vadd.f32 0.0, %v500
    %502 = vdwg.mxu0
    %v503 = vadd.f32 %v442, %v461
    %v504 = vmul.f32 %v503, 0.5
    %v505 = vtanh.pop %v504
    %v506 = vmul.f32 %v505, 0.5
    %v507 = vadd.f32 %v506, 0.5
    %v509 = vrot.slane %v442, 1
    %v511 = vadd.f32 %v509, %v481
    %v512 = vmul.f32 %v511, 0.5
    %v513 = vtanh.pop %v512
    %v514 = vmul.f32 %v513, 0.5
    %v515 = vadd.f32 %v514, 0.5
    %v516 = vadd.f32 %v501, %v152
    %v517 = vmul.f32 %v507, %v516
    %v518 = vrot.slane %v442, 2
    %v520 = vadd.f32 %v518, %v517
    %v521 = vtanh.pop %v520
    %v522 = vsub.f32 1.0, %v515
    %v523 = vmul.f32 %v522, %v521
    %v524 = vmul.f32 %v515, %v432
    %v525 = vadd.f32 %v523, %v524
    %s526 = sld [smem:[#allocation2 + $0x4]]
    %s527 = sshra.s32 %s526, 3
    %s528 = sand.u32 %s526, 7
    %s529 = sshra.s32 %s526, 3
    %s530 = sand.u32 %s526, 7
    %s531 = smul.u32 %s527, 3
    %s532 = smul.u32 %s531, 8
    %s533 = sadd.s32 %s532, %s530
    %s534 = scalar_lea.vmem [#allocation7], %s533
    %v535 = vld [vmem:[%s534] ss:$8 sm:$0x7]
    %536 = vmatpush.msra.mxu0 %v149
    %537 = vmatpush.msra.mxu0 %v146
    %538 = vmatpush.msra.mxu0 %v143
    %539 = vmatpush.msra.mxu0 %v140
    %540 = vmatpush.msra.mxu0 %v137
    %541 = vmatpush.msra.mxu0 %v134
    %542 = vmatpush.msra.mxu0 %v131
    %543 = vmatpush.msra.mxu0 %v128
    %544 = vmatpush.msra.mxu0 %v125
    %545 = vmatpush.msra.mxu0 %v122
    %546 = vmatpush.msra.mxu0 %v119
    %547 = vmatpush.msra.mxu0 %v116
    %548 = vmatpush.msra.mxu0 %v113
    %549 = vmatpush.msra.mxu0 %v110
    %550 = vmatpush.msra.mxu0 %v107
    %551 = vmatpush.msra.mxu0 %v104
    %552 = vmatmul.f32.gmra.mxu0 %v525
    %v553 = vpop.f32.mrf.mxu0
    %v554 = vadd.f32 0.0, %v553
    %555 = vdwg.mxu0
    %556 = vmatpush.msra.mxu0 %v150
    %557 = vmatpush.msra.mxu0 %v147
    %558 = vmatpush.msra.mxu0 %v144
    %559 = vmatpush.msra.mxu0 %v141
    %560 = vmatpush.msra.mxu0 %v138
    %561 = vmatpush.msra.mxu0 %v135
    %562 = vmatpush.msra.mxu0 %v132
    %563 = vmatpush.msra.mxu0 %v129
    %564 = vmatpush.msra.mxu0 %v126
    %565 = vmatpush.msra.mxu0 %v123
    %566 = vmatpush.msra.mxu0 %v120
    %567 = vmatpush.msra.mxu0 %v117
    %568 = vmatpush.msra.mxu0 %v114
    %569 = vmatpush.msra.mxu0 %v111
    %570 = vmatpush.msra.mxu0 %v108
    %571 = vmatpush.msra.mxu0 %v105
    %572 = vmatmul.f32.gmra.mxu0 %v525
    %v573 = vpop.f32.mrf.mxu0
    %v574 = vadd.f32 0.0, %v573
    %575 = vdwg.mxu0
    %576 = vmatpush.msra.mxu0 %v151
    %577 = vmatpush.msra.mxu0 %v148
    %578 = vmatpush.msra.mxu0 %v145
    %579 = vmatpush.msra.mxu0 %v142
    %580 = vmatpush.msra.mxu0 %v139
    %581 = vmatpush.msra.mxu0 %v136
    %582 = vmatpush.msra.mxu0 %v133
    %583 = vmatpush.msra.mxu0 %v130
    %584 = vmatpush.msra.mxu0 %v127
    %585 = vmatpush.msra.mxu0 %v124
    %586 = vmatpush.msra.mxu0 %v121
    %587 = vmatpush.msra.mxu0 %v118
    %588 = vmatpush.msra.mxu0 %v115
    %589 = vmatpush.msra.mxu0 %v112
    %590 = vmatpush.msra.mxu0 %v109
    %591 = vmatpush.msra.mxu0 %v106
    %592 = vmatmul.f32.gmra.mxu0 %v525
    %v593 = vpop.f32.mrf.mxu0
    %v594 = vadd.f32 0.0, %v593
    %595 = vdwg.mxu0
    %v596 = vadd.f32 %v535, %v554
    %v597 = vmul.f32 %v596, 0.5
    %v598 = vtanh.pop %v597
    %v599 = vmul.f32 %v598, 0.5
    %v600 = vadd.f32 %v599, 0.5
    %v602 = vrot.slane %v535, 1
    %v604 = vadd.f32 %v602, %v574
    %v605 = vmul.f32 %v604, 0.5
    %v606 = vtanh.pop %v605
    %v607 = vmul.f32 %v606, 0.5
    %v608 = vadd.f32 %v607, 0.5
    %v609 = vadd.f32 %v594, %v152
    %v610 = vmul.f32 %v600, %v609
    %v611 = vrot.slane %v535, 2
    %v613 = vadd.f32 %v611, %v610
    %v614 = vtanh.pop %v613
    %v615 = vsub.f32 1.0, %v608
    %v616 = vmul.f32 %v615, %v614
    %v617 = vmul.f32 %v608, %v525
    %v618 = vadd.f32 %v616, %v617
    %v619 = vld [vmem:[#allocation10] sm:$0xff]
    %v620 = vld [vmem:[#allocation10 + $0x8] sm:$0xff]
    %v621 = vld [vmem:[#allocation10 + $0x10] sm:$0xff]
    %v622 = vld [vmem:[#allocation10 + $0x18] sm:$0xff]
    %v623 = vld [vmem:[#allocation10 + $0x20] sm:$0xff]
    %v624 = vld [vmem:[#allocation10 + $0x28] sm:$0xff]
    %v625 = vld [vmem:[#allocation10 + $0x30] sm:$0xff]
    %v626 = vld [vmem:[#allocation10 + $0x38] sm:$0xff]
    %v627 = vld [vmem:[#allocation10 + $0x40] sm:$0xff]
    %v628 = vld [vmem:[#allocation10 + $0x48] sm:$0xff]
    %v629 = vld [vmem:[#allocation10 + $0x50] sm:$0xff]
    %v630 = vld [vmem:[#allocation10 + $0x58] sm:$0xff]
    %v631 = vld [vmem:[#allocation10 + $0x60] sm:$0xff]
    %v632 = vld [vmem:[#allocation10 + $0x68] sm:$0xff]
    %v633 = vld [vmem:[#allocation10 + $0x70] sm:$0xff]
    %v634 = vld [vmem:[#allocation10 + $0x78] sm:$0xff]
    %v635 = vld [vmem:[%s6] sm:$0x1]
    %636 = vmatpush.msra.mxu0 %v634
    %637 = vmatpush.msra.mxu0 %v633
    %638 = vmatpush.msra.mxu0 %v632
    %639 = vmatpush.msra.mxu0 %v631
    %640 = vmatpush.msra.mxu0 %v630
    %641 = vmatpush.msra.mxu0 %v629
    %642 = vmatpush.msra.mxu0 %v628
    %643 = vmatpush.msra.mxu0 %v627
    %644 = vmatpush.msra.mxu0 %v626
    %645 = vmatpush.msra.mxu0 %v625
    %646 = vmatpush.msra.mxu0 %v624
    %647 = vmatpush.msra.mxu0 %v623
    %648 = vmatpush.msra.mxu0 %v622
    %649 = vmatpush.msra.mxu0 %v621
    %650 = vmatpush.msra.mxu0 %v620
    %651 = vmatpush.msra.mxu0 %v619
    %652 = vmatmul.f32.gmra.mxu0 %v618
    %v653 = vpop.f32.mrf.mxu0
    %v654 = vadd.f32 %v635, %v653
    %655 = vdwg.mxu0
    %vm656 = vcmask 1040384
    %v657 = vsel %vm656, %v654, -inf
    %658 = vmax.xlane.f32.xlu0 %v657
    %v659 = vpop.xlane.xlu0 %658
    %v660 = vsub.f32 %v654, %v659
    %v661 = vmul.f32 %v660, 1.442695
    %v662 = vpow.pop %v661
    %v663 = vsel %vm656, %v662, 0.0
    %664 = vadd.xlane.f32.xlu0 %v663
    %v665 = vpop.xlane.xlu0 %664
    %v666 = vlog2.pop %v665
    %v667 = vmul.f32 %v666, 0.6931472
    %v668 = vadd.f32 %v667, %v659
    %v669 = vsub.f32 %v654, %v668
    %670 = vst [vmem:[#allocation12] sm:$0x1] %v669
    %671 = vst [vmem:[#allocation13] sm:$0x1] %v618
    // Predicated region
    $region50: #{tpu_custom_call.1} parent=1 // pred_check
      _
    $region51: #{tpu_custom_call.1} parent=1 // pred_check_branch
      %673 = sbr.rel (0) target = $region53
    $region52: #{tpu_custom_call.1} parent=1 // pred_region
      %675 = vsyncadd [#allocation4], 0
      %s677 = sshll.u32 [#allocation12], 4
      %s678 = int_to_ptr.vmem [resolvable:$true] %s677
      %s679 = sshll.u32 %s7, 4
      %s680 = int_to_ptr.hbm [resolvable:$true] %s679
      %682 = dma.vmem_to_hbm [thread:$0]  %s678, 16, %s680, [#allocation4]
    $region53: #{tpu_custom_call.1} parent=1 // pred_fallthru
      _
    // Predicated region
    $region54: #{tpu_custom_call.1} parent=1 // pred_check
      _
    $region55: #{tpu_custom_call.1} parent=1 // pred_check_branch
      %684 = sbr.rel (0) target = $region57
    $region56: #{tpu_custom_call.1} parent=1 // pred_region
      %686 = vsyncadd [#allocation14], 0
      %s688 = sshll.u32 [#allocation13], 4
      %s689 = int_to_ptr.vmem [resolvable:$true] %s688
      %s690 = sshll.u32 %s8, 4
      %s691 = int_to_ptr.hbm [resolvable:$true] %s690
      %693 = dma.vmem_to_hbm [thread:$0]  %s689, 16, %s691, [#allocation14]
    $region57: #{tpu_custom_call.1} parent=1 // pred_fallthru
      _
    // Predicated region
    $region58: #{tpu_custom_call.1} parent=1 // pred_check
      _
    $region59: #{tpu_custom_call.1} parent=1 // pred_check_branch
      %695 = sbr.rel (0) target = $region61
    $region60: #{tpu_custom_call.1} parent=1 // pred_region
      %697 = dma.done [#allocation4], 16
    $region61: #{tpu_custom_call.1} parent=1 // pred_fallthru
      _
    // Predicated region
    $region62: #{tpu_custom_call.1} parent=1 // pred_check
      _
    $region63: #{tpu_custom_call.1} parent=1 // pred_check_branch
      %699 = sbr.rel (0) target = $region65
    $region64: #{tpu_custom_call.1} parent=1 // pred_region
      %701 = dma.done [#allocation14], 16
    $region65: #{tpu_custom_call.1} parent=1 // pred_fallthru
      _
    %702 = vsyncpa [#allocation3], 1
    %703 = vsyncpa [#allocation8], 1
    %704 = vsyncpa [#allocation11], 1
    %705 = vsyncpa [#allocation4], 1
    %706 = vsyncpa [#allocation14], 1
    %707 = vsyncpa [#allocation5], 1

</llo_original>
